<compile_context>
chip_gen: v7x
topology: tpu7x:2x2x1
jax: 0.10.0
libtpu: 0.0.40
codegen_flags: <defaults>
</compile_context>

<pallas_src>
import functools

import jax
import jax.numpy as jnp
from jax.experimental import pallas as pl
from jax.experimental.pallas import tpu as pltpu


# --------------------------------------------------------------------------
# Kernels
# --------------------------------------------------------------------------
def kv_precompute_kernel(fk_ref, wphid_ref, bphid_ref, wphi2_ref, bphi2_ref,
                         kT_ref, v_ref, *, k_pad):
    """Per-batch pre-pass: key = phi(f_k) (pre-transposed), value = f_down(f_k)."""
    fk = fk_ref[0]                                             # (M_pad, C_pad) bf16
    # Fused phi1 | f_down matmul: one (C_pad, 2*K_pad) weight.
    hv = jnp.dot(fk, wphid_ref[...],
                 preferred_element_type=jnp.float32) + bphid_ref[...]
    hv = jnp.maximum(hv, 0.0)                                  # (M_pad, 2*K_pad) f32
    h = hv[:, :k_pad].astype(jnp.bfloat16)                     # phi layer-1 output
    v = hv[:, k_pad:]                                          # f_down output (f32)
    k = jnp.dot(h, wphi2_ref[...],
                preferred_element_type=jnp.float32) + bphi2_ref[...]
    k = jnp.maximum(k, 0.0)                                    # (M_pad, K_pad) f32
    kT_ref[0] = jnp.transpose(k).astype(jnp.bfloat16)          # (K_pad, M_pad)
    v_ref[0] = v.astype(jnp.bfloat16)                          # (M_pad, K_pad)


def object_attention_kernel(x_ref, kT_ref, v_ref,
                            wpsi1_ref, bpsi1_ref, wpsi2_ref, bpsi2_ref,
                            wfu_ref, bfu_ref, out_ref, *, m_actual):
    """Per (batch, query-tile) attention: query = psi(x); softmax(q k^T) v; f_up."""
    x = x_ref[0]                                               # (TQ, C_pad) bf16

    def affine_relu(t, w_ref, b_ref):
        # MXU in bf16, accumulate in f32; bias-add + ReLU stay f32 (v5e VPU),
        # result cast back to bf16 to halve intermediate vreg/VMEM footprint.
        y = jnp.dot(t, w_ref[...], preferred_element_type=jnp.float32) + b_ref[...]
        return jnp.maximum(y, 0.0).astype(jnp.bfloat16)

    # query = psi(x): two folded conv-bn-relu layers -> (TQ, K_pad) bf16
    q = affine_relu(affine_relu(x, wpsi1_ref, bpsi1_ref), wpsi2_ref, bpsi2_ref)

    # sim = q @ k^T, with k pre-transposed to (K_pad, M_pad): plain contraction.
    sim = jnp.dot(q, kT_ref[0], preferred_element_type=jnp.float32)  # (TQ, M_pad)

    # Mask padded object columns so they get zero softmax weight.
    col = jax.lax.broadcasted_iota(jnp.int32, sim.shape, 1)
    sim = jnp.where(col < m_actual, sim, -jnp.inf)

    # Softmax over the object axis (f32); divide via EUP reciprocal.
    sim = sim - jnp.max(sim, axis=-1, keepdims=True)
    p = jnp.exp(sim)
    p = p * pl.reciprocal(jnp.sum(p, axis=-1, keepdims=True), approx=True)

    # context = sim @ value -> (TQ, K_pad), then f_up -> (TQ, C_pad), bf16 out.
    ctx = jnp.dot(p.astype(jnp.bfloat16), v_ref[0],
                  preferred_element_type=jnp.float32)
    out = jnp.dot(ctx.astype(jnp.bfloat16), wfu_ref[...],
                  preferred_element_type=jnp.float32) + bfu_ref[...]
    out_ref[0] = jnp.maximum(out, 0.0).astype(jnp.bfloat16)


# --------------------------------------------------------------------------
# Wrapper
# --------------------------------------------------------------------------
def _round_up(x, m):
    return (x + m - 1) // m * m


def _pad_params(params, c_pad, k_pad):
    """Zero-pad weights/biases so padded rows/cols are inert (relu(0)=0)."""
    def pw(w, rows, cols):
        return jnp.pad(w, ((0, rows - w.shape[0]), (0, cols - w.shape[1]))
                       ).astype(jnp.bfloat16)

    def pb(b, cols):
        return jnp.pad(b, ((0, 0), (0, cols - b.shape[1]))).astype(jnp.float32)

    return {
        "wpsi1": pw(params["wpsi1"], c_pad, k_pad), "bpsi1": pb(params["bpsi1"], k_pad),
        "wpsi2": pw(params["wpsi2"], k_pad, k_pad), "bpsi2": pb(params["bpsi2"], k_pad),
        "wphi1": pw(params["wphi1"], c_pad, k_pad), "bphi1": pb(params["bphi1"], k_pad),
        "wphi2": pw(params["wphi2"], k_pad, k_pad), "bphi2": pb(params["bphi2"], k_pad),
        "wfd":   pw(params["wfd"],   c_pad, k_pad), "bfd":   pb(params["bfd"],   k_pad),
        "wfu":   pw(params["wfu"],   k_pad, c_pad), "bfu":   pb(params["bfu"],   c_pad),
    }


def object_attention(x_nchw, fk_nchw, params, *, tq=1024):
    N, C, H, W = x_nchw.shape
    _, _, Hk, Wk = fk_nchw.shape
    HW, M = H * W, Hk * Wk
    K = params["wpsi1"].shape[1]

    # Padded, lane-dense dimensions.
    C_pad = _round_up(C, 128)
    K_pad = _round_up(K, 128)
    M_pad = _round_up(M, 128)

    # Query-tile rows (multiple of 8). Keep >= 2 total grid steps so both
    # TensorCores get work on megacore parts (v7x).
    TQ = _round_up(min(tq, _round_up(HW, 8)), 8)
    HW_pad = _round_up(HW, TQ)
    while N * (HW_pad // TQ) < 2 and TQ > 8:
        TQ = max(8, _round_up(TQ // 2, 8))
        HW_pad = _round_up(HW, TQ)

    # NCHW -> token-major (N, HW, C); pad tokens/channels; bf16 for MXU + BW.
    x_tok = jnp.transpose(x_nchw, (0, 2, 3, 1)).reshape(N, HW, C)
    fk_tok = jnp.transpose(fk_nchw, (0, 2, 3, 1)).reshape(N, M, C)
    x_tok = jnp.pad(x_tok, ((0, 0), (0, HW_pad - HW), (0, C_pad - C))
                    ).astype(jnp.bfloat16)
    fk_tok = jnp.pad(fk_tok, ((0, 0), (0, M_pad - M), (0, C_pad - C))
                     ).astype(jnp.bfloat16)

    p = _pad_params(params, C_pad, K_pad)
    # Fuse phi layer-1 and f_down into one wider matmul for the pre-pass.
    wphid = jnp.concatenate([p["wphi1"], p["wfd"]], axis=1)    # (C_pad, 2*K_pad)
    bphid = jnp.concatenate([p["bphi1"], p["bfd"]], axis=1)    # (1, 2*K_pad)

    # ---- per-batch k/v pre-pass (hoisted out of the per-tile kernel) ----
    kT, v = pl.pallas_call(
        functools.partial(kv_precompute_kernel, k_pad=K_pad),
        out_shape=(jax.ShapeDtypeStruct((N, K_pad, M_pad), jnp.bfloat16),
                   jax.ShapeDtypeStruct((N, M_pad, K_pad), jnp.bfloat16)),
        grid_spec=pl.GridSpec(
            grid=(N,),
            in_specs=[pl.BlockSpec((1, M_pad, C_pad), lambda b: (b, 0, 0)),
                      pl.BlockSpec(wphid.shape, lambda b: (0, 0)),
                      pl.BlockSpec(bphid.shape, lambda b: (0, 0)),
                      pl.BlockSpec(p["wphi2"].shape, lambda b: (0, 0)),
                      pl.BlockSpec(p["bphi2"].shape, lambda b: (0, 0))],
            out_specs=(pl.BlockSpec((1, K_pad, M_pad), lambda b: (b, 0, 0)),
                       pl.BlockSpec((1, M_pad, K_pad), lambda b: (b, 0, 0))),
        ),
        compiler_params=pltpu.CompilerParams(dimension_semantics=("parallel",)),
    )(fk_tok, wphid, bphid, p["wphi2"], p["bphi2"])

    # ---- main per-tile attention kernel ----
    main_w = [p[n] for n in ("wpsi1", "bpsi1", "wpsi2", "bpsi2", "wfu", "bfu")]
    kernel = functools.partial(object_attention_kernel, m_actual=M)

    cost = pl.CostEstimate(
        flops=int(2 * N * HW_pad * (C_pad * K_pad + K_pad * K_pad
                                    + K_pad * M_pad + M_pad * K_pad
                                    + K_pad * C_pad)),
        transcendentals=int(N * HW_pad * M_pad),
        bytes_accessed=int(
            N * HW_pad * C_pad * 2 * 2                         # x read + out write
            + N * (K_pad * M_pad + M_pad * K_pad) * 2          # kT, v
            + (C_pad * K_pad + K_pad * K_pad + K_pad * C_pad) * 2
            + (2 * K_pad + C_pad) * 4))

    def attention_call(weight_pipeline_mode):
        if weight_pipeline_mode is None:
            w_specs = [pl.BlockSpec(w.shape, lambda b, q: (0, 0)) for w in main_w]
        else:
            w_specs = [pl.BlockSpec(w.shape, lambda b, q: (0, 0),
                                    pipeline_mode=weight_pipeline_mode)
                       for w in main_w]
        return pl.pallas_call(
            kernel,
            out_shape=jax.ShapeDtypeStruct((N, HW_pad, C_pad), jnp.bfloat16),
            grid_spec=pl.GridSpec(
                grid=(N, HW_pad // TQ),
                in_specs=[pl.BlockSpec((1, TQ, C_pad), lambda b, q: (b, q, 0)),
                          pl.BlockSpec((1, K_pad, M_pad), lambda b, q: (b, 0, 0)),
                          pl.BlockSpec((1, M_pad, K_pad), lambda b, q: (b, 0, 0))]
                         + w_specs,
                out_specs=pl.BlockSpec((1, TQ, C_pad), lambda b, q: (b, q, 0)),
            ),
            compiler_params=pltpu.CompilerParams(
                dimension_semantics=("parallel", "parallel"),
                # Actual usage is a few MB; limit only matters if TQ is grown.
                vmem_limit_bytes=64 * 1024 * 1024),
            cost_estimate=cost,
        )(x_tok, kT, v, *main_w)

    try:
        # Grid-invariant weights/biases: single buffering (no wasted VMEM copy).
        out_tok = attention_call(pl.Buffered(1))
    except Exception:
        # Fallback if single-buffered BlockSpecs aren't supported by this jax.
        out_tok = attention_call(None)

    out_tok = out_tok[:, :HW, :C]
    return jnp.transpose(out_tok.reshape(N, H, W, C), (0, 3, 1, 2))


# --------------------------------------------------------------------------
# Pure-JAX reference & synthetic params
# --------------------------------------------------------------------------
def reference(x_nchw, fk_nchw, p):
    """Pure-JAX f32 reference mirroring the PyTorch forward (use_gt=False)."""
    N, C, H, W = x_nchw.shape
    _, _, Hk, Wk = fk_nchw.shape
    x_tok = jnp.transpose(x_nchw, (0, 2, 3, 1)).reshape(N, H * W, C)
    fk_tok = jnp.transpose(fk_nchw, (0, 2, 3, 1)).reshape(N, Hk * Wk, C)

    def ar(t, w, b):
        return jnp.maximum(t @ w + b, 0.0)

    q = ar(ar(x_tok, p["wpsi1"], p["bpsi1"]), p["wpsi2"], p["bpsi2"])
    k = ar(ar(fk_tok, p["wphi1"], p["bphi1"]), p["wphi2"], p["bphi2"])
    v = ar(fk_tok, p["wfd"], p["bfd"])
    sim = jnp.einsum("nqc,nkc->nqk", q, k)
    sim = jax.nn.softmax(sim, axis=-1)
    ctx = jnp.einsum("nqk,nkc->nqc", sim, v)
    out = ar(ctx, p["wfu"], p["bfu"])
    return jnp.transpose(out.reshape(N, H, W, C), (0, 3, 1, 2))


def make_params(in_channels, key_channels, seed=0):
    """Deterministic synthetic params; conv(1x1)+BN folded into (W, b)."""
    key = jax.random.PRNGKey(seed)
    dims = {
        "psi1": (in_channels, key_channels), "psi2": (key_channels, key_channels),
        "phi1": (in_channels, key_channels), "phi2": (key_channels, key_channels),
        "fd":   (in_channels, key_channels), "fu":  (key_channels, in_channels),
    }
    params = {}
    for name, (din, dout) in dims.items():
        key, kw, kb = jax.random.split(key, 3)
        params["w" + name] = (0.1 * jax.random.normal(kw, (din, dout))).astype(jnp.float32)
        params["b" + name] = (0.1 * jax.random.normal(kb, (1, dout))).astype(jnp.float32)
    return params


if __name__ == "__main__":
    # Small shapes: batch=2, in_channels=32, key_channels=16, x spatial 16x16,
    # f_k (object-region features) spatial 8x1 -> 8 "objects".
    N, C_IN, KEY_C = 2, 32, 16
    H = W = 16
    HK, WK = 8, 1

    key = jax.random.PRNGKey(0)
    kx, kf = jax.random.split(key)
    x = jax.random.normal(kx, (N, C_IN, H, W), dtype=jnp.float32)
    f_k = jax.random.normal(kf, (N, C_IN, HK, WK), dtype=jnp.float32)

    params = make_params(C_IN, KEY_C, seed=0)

    out = object_attention(x, f_k, params)
    out = jax.block_until_ready(out)

    ref = reference(x, f_k, params)
    assert out.shape == (N, C_IN, H, W)
    # bf16 MXU operands / bf16 output + approx reciprocal -> relaxed tolerance.
    assert jnp.allclose(out, ref, atol=3e-2, rtol=3e-2), \
        f"max abs err {jnp.max(jnp.abs(out - ref))}"

    print("KERNEL_OK")
</pallas_src>

<mosaic_0001>
module attributes {stable_mosaic.version = 11 : i64} {
  func.func @kv_precompute_kernel(%arg0: i32, %arg1: memref<1x128x128xbf16, #tpu.memory_space<vmem>>, %arg2: memref<128x256xbf16, #tpu.memory_space<vmem>>, %arg3: memref<1x256xf32, #tpu.memory_space<vmem>>, %arg4: memref<128x128xbf16, #tpu.memory_space<vmem>>, %arg5: memref<1x128xf32, #tpu.memory_space<vmem>>, %arg6: memref<1x128x128xbf16, #tpu.memory_space<vmem>>, %arg7: memref<1x128x128xbf16, #tpu.memory_space<vmem>>) attributes {dimension_semantics = [#tpu.dimension_semantics<parallel>], iteration_bounds = array<i64: 2>, scalar_prefetch = 0 : i64, scratch_operands = 0 : i64, tpu.core_type = #tpu.core_type<tc>, window_params = [{transform_indices = @transform_0, window_bounds = array<i64: 1, 128, 128>}, {pipeline_mode = #tpu.pipeline_mode<synchronous>, transform_indices = @transform_1, window_bounds = array<i64: 128, 256>}, {pipeline_mode = #tpu.pipeline_mode<synchronous>, transform_indices = @transform_2, window_bounds = array<i64: 1, 256>}, {pipeline_mode = #tpu.pipeline_mode<synchronous>, transform_indices = @transform_3, window_bounds = array<i64: 128, 128>}, {pipeline_mode = #tpu.pipeline_mode<synchronous>, transform_indices = @transform_4, window_bounds = array<i64: 1, 128>}, {transform_indices = @transform_5, window_bounds = array<i64: 1, 128, 128>}, {transform_indices = @transform_6, window_bounds = array<i64: 1, 128, 128>}]} {
    %c0 = arith.constant 0 : index
    %c0_0 = arith.constant 0 : index
    %c0_1 = arith.constant 0 : index
    %0 = vector.load %arg1[%c0, %c0_0, %c0_1] : memref<1x128x128xbf16, #tpu.memory_space<vmem>>, vector<1x128x128xbf16>
    %1 = vector.shape_cast %0 : vector<1x128x128xbf16> to vector<128x128xbf16>
    %c0_2 = arith.constant 0 : index
    %c0_3 = arith.constant 0 : index
    %2 = vector.load %arg2[%c0_2, %c0_3] : memref<128x256xbf16, #tpu.memory_space<vmem>>, vector<128x256xbf16>
    %cst = arith.constant dense<0.000000e+00> : vector<128x256xf32>
    %3 = tpu.matmul %1, %2, %cst {dimension_numbers = #tpu.dot_dimension_numbers<[1], [0], [0], [1], [0, 0, 1, 1], [], []>} : vector<128x128xbf16>, vector<128x256xbf16>, vector<128x256xf32> -> vector<128x256xf32>
    %c0_4 = arith.constant 0 : index
    %c0_5 = arith.constant 0 : index
    %4 = vector.load %arg3[%c0_4, %c0_5] : memref<1x256xf32, #tpu.memory_space<vmem>>, vector<1x256xf32>
    %5 = vector.broadcast %4 : vector<1x256xf32> to vector<128x256xf32>
    %6 = arith.addf %3, %5 : vector<128x256xf32>
    %cst_6 = arith.constant 0.000000e+00 : f32
    %7 = vector.broadcast %cst_6 : f32 to vector<128x256xf32>
    %8 = arith.maximumf %6, %7 : vector<128x256xf32>
    %9 = vector.extract_strided_slice %8 {offsets = [0, 0], sizes = [128, 128], strides = [1, 1]} : vector<128x256xf32> to vector<128x128xf32>
    %10 = arith.truncf %9 : vector<128x128xf32> to vector<128x128xbf16>
    %11 = vector.extract_strided_slice %8 {offsets = [0, 128], sizes = [128, 128], strides = [1, 1]} : vector<128x256xf32> to vector<128x128xf32>
    %c0_7 = arith.constant 0 : index
    %c0_8 = arith.constant 0 : index
    %12 = vector.load %arg4[%c0_7, %c0_8] : memref<128x128xbf16, #tpu.memory_space<vmem>>, vector<128x128xbf16>
    %cst_9 = arith.constant dense<0.000000e+00> : vector<128x128xf32>
    %13 = tpu.matmul %10, %12, %cst_9 {dimension_numbers = #tpu.dot_dimension_numbers<[1], [0], [0], [1], [0, 0, 1, 1], [], []>} : vector<128x128xbf16>, vector<128x128xbf16>, vector<128x128xf32> -> vector<128x128xf32>
    %c0_10 = arith.constant 0 : index
    %c0_11 = arith.constant 0 : index
    %14 = vector.load %arg5[%c0_10, %c0_11] : memref<1x128xf32, #tpu.memory_space<vmem>>, vector<1x128xf32>
    %15 = vector.broadcast %14 : vector<1x128xf32> to vector<128x128xf32>
    %16 = arith.addf %13, %15 : vector<128x128xf32>
    %cst_12 = arith.constant 0.000000e+00 : f32
    %17 = vector.broadcast %cst_12 : f32 to vector<128x128xf32>
    %18 = arith.maximumf %16, %17 : vector<128x128xf32>
    %19 = tpu.transpose %18, [1, 0] : vector<128x128xf32> -> vector<128x128xf32>
    %20 = arith.truncf %19 : vector<128x128xf32> to vector<128x128xbf16>
    %c0_13 = arith.constant 0 : index
    %c0_14 = arith.constant 0 : index
    %c0_15 = arith.constant 0 : index
    %21 = vector.load %arg6[%c0_13, %c0_14, %c0_15] : memref<1x128x128xbf16, #tpu.memory_space<vmem>>, vector<1x128x128xbf16>
    %22 = vector.shape_cast %21 : vector<1x128x128xbf16> to vector<128x128xbf16>
    %23 = vector.shape_cast %20 : vector<128x128xbf16> to vector<1x128x128xbf16>
    tpu.vector_store %arg6[%c0_13, %c0_14, %c0_15], %23 {strides = array<i32>} : memref<1x128x128xbf16, #tpu.memory_space<vmem>>, vector<1x128x128xbf16>,
    %24 = arith.truncf %11 : vector<128x128xf32> to vector<128x128xbf16>
    %c0_16 = arith.constant 0 : index
    %c0_17 = arith.constant 0 : index
    %c0_18 = arith.constant 0 : index
    %25 = vector.load %arg7[%c0_16, %c0_17, %c0_18] : memref<1x128x128xbf16, #tpu.memory_space<vmem>>, vector<1x128x128xbf16>
    %26 = vector.shape_cast %25 : vector<1x128x128xbf16> to vector<128x128xbf16>
    %27 = vector.shape_cast %24 : vector<128x128xbf16> to vector<1x128x128xbf16>
    tpu.vector_store %arg7[%c0_16, %c0_17, %c0_18], %27 {strides = array<i32>} : memref<1x128x128xbf16, #tpu.memory_space<vmem>>, vector<1x128x128xbf16>,
    return
  }
  func.func @transform_0(%arg0: i32) -> (i32, i32, i32) {
    %c0_i32 = arith.constant 0 : i32
    %c0_i32_0 = arith.constant 0 : i32
    %c0_i32_1 = arith.constant 0 : i32
    return %arg0, %c0_i32, %c0_i32_0 : i32, i32, i32
  }
  func.func @transform_1(%arg0: i32) -> (i32, i32) {
    %c0_i32 = arith.constant 0 : i32
    %c0_i32_0 = arith.constant 0 : i32
    %c0_i32_1 = arith.constant 0 : i32
    return %c0_i32, %c0_i32_0 : i32, i32
  }
  func.func @transform_2(%arg0: i32) -> (i32, i32) {
    %c0_i32 = arith.constant 0 : i32
    %c0_i32_0 = arith.constant 0 : i32
    %c0_i32_1 = arith.constant 0 : i32
    return %c0_i32, %c0_i32_0 : i32, i32
  }
  func.func @transform_3(%arg0: i32) -> (i32, i32) {
    %c0_i32 = arith.constant 0 : i32
    %c0_i32_0 = arith.constant 0 : i32
    %c0_i32_1 = arith.constant 0 : i32
    return %c0_i32, %c0_i32_0 : i32, i32
  }
  func.func @transform_4(%arg0: i32) -> (i32, i32) {
    %c0_i32 = arith.constant 0 : i32
    %c0_i32_0 = arith.constant 0 : i32
    %c0_i32_1 = arith.constant 0 : i32
    return %c0_i32, %c0_i32_0 : i32, i32
  }
  func.func @transform_5(%arg0: i32) -> (i32, i32, i32) {
    %c0_i32 = arith.constant 0 : i32
    %c0_i32_0 = arith.constant 0 : i32
    %c0_i32_1 = arith.constant 0 : i32
    return %arg0, %c0_i32, %c0_i32_0 : i32, i32, i32
  }
  func.func @transform_6(%arg0: i32) -> (i32, i32, i32) {
    %c0_i32 = arith.constant 0 : i32
    %c0_i32_0 = arith.constant 0 : i32
    %c0_i32_1 = arith.constant 0 : i32
    return %arg0, %c0_i32, %c0_i32_0 : i32, i32, i32
  }
}

</mosaic_0001>

<llo_original>
// kernel: tpu_custom_call.1
$region0: #{tpu_custom_call.1}
  #allocation0 [shape = 'u32[]', space=smem, size = 0x4, offset = 0x4, fixed_abs, tag = 'smem constant byte address 0x4 - core index']
  #allocation1 [shape = 'u32[144,128]{1,0:T(1,128)}', space=vmem, size = 0x12000, scoped, tag = 'internal scratch']
  %s0 = inlined_call_operand.hbm [shape: bf16[2,128,128], index: 0, kind: input, shape index: {}]
  %s1 = inlined_call_operand.hbm [shape: bf16[128,256], index: 1, kind: input, shape index: {}]
  %s2 = inlined_call_operand.vmem [shape: f32[1,256], index: 2, kind: input, shape index: {}]
  %s3 = inlined_call_operand.hbm [shape: bf16[128,128], index: 3, kind: input, shape index: {}]
  %s4 = inlined_call_operand.vmem [shape: f32[1,128], index: 4, kind: input, shape index: {}]
  %s5 = inlined_call_operand.hbm [shape: bf16[2,128,128], index: 5, kind: output, shape index: {0}]
  %s6 = inlined_call_operand.hbm [shape: bf16[2,128,128], index: 6, kind: output, shape index: {1}]
  %7 = xla_tuple %s5, %s6
  %s8 = sld [smem:[#allocation0]]
  $region73: #{tpu_custom_call.1} parent=0
    _
  %s10 = ssub.s32 1, %s8
  %s11 = scalar_select 0, %s10, %s8
  $region1: #{tpu_custom_call.1} parent=0
    #allocation2 [shape = 'u8[65536]{0}', space=vmem, size = 0x10000, scoped, tag = 'input window, operand 0']
    #allocation3 [shape = 's32[2]{0}', space=sflag, size = 0x8, scoped, tag = 'scoped memory for tpu_custom_call.1']
    #allocation4 [shape = 's32[2]{0}', space=sflag, size = 0x8, scoped, tag = 'scoped memory for tpu_custom_call.1']
    #allocation5 [shape = 'u8[65536]{0}', space=vmem, size = 0x10000, scoped, tag = 'input window, operand 1, single buffered']
    #allocation6 [shape = 's32[1]{0}', space=sflag, size = 0x4, scoped, tag = 'scoped memory for tpu_custom_call.1']
    #allocation7 [shape = 'u8[32768]{0}', space=vmem, size = 0x8000, scoped, tag = 'input window, operand 3, single buffered']
    #allocation8 [shape = 'u8[65536]{0}', space=vmem, size = 0x10000, scoped, tag = 'output window, operand 0']
    #allocation9 [shape = 'u8[65536]{0}', space=vmem, size = 0x10000, scoped, tag = 'output window, operand 1']
    #allocation10 [shape = 's32[2]{0}', space=sflag, size = 0x8, scoped, tag = 'scoped memory for tpu_custom_call.1']
    %12 = vsyncpa [#allocation3], 0
    %s13 = scalar_lea.sflag [#allocation3], 1
    %14 = vsyncpa %s13, 0
    %15 = vsyncpa [#allocation6], 0
    %16 = vsyncpa [#allocation4], 0
    %s17 = scalar_lea.sflag [#allocation4], 1
    %18 = vsyncpa %s17, 0
    %19 = vsyncpa [#allocation10], 0
    %s20 = scalar_lea.sflag [#allocation10], 1
    %21 = vsyncpa %s20, 0
    loop: start=0, step=1, limit=4
    $region2: #{tpu_custom_call.1} parent=1 // loop_pre_header
      _
    $region3: #{tpu_custom_call.1} parent=1 // loop_header
      %s23 = sphi 0, %s27
      %p24 = scmp.ge.s32.totalorder %s23, 4
      %s33 = sphi 0, %s35
      %s36 = sphi 0, %s33
      %s37 = sphi 0, %s36
      %s53 = sphi 0, %s37
      %s57 = sphi 0, %s57
      %s59 = sphi 0, %s57
      %s60 = sphi 0, %s59
      %s74 = sphi 0, %s60
      %s78 = sphi 0, %s78
      %s80 = sphi 0, %s78
      %s81 = sphi 0, %s80
      %s95 = sphi 0, %s81
      %s99 = sphi 0, %s99
      %s101 = sphi 0, %s99
      %s102 = sphi 0, %s101
      %s116 = sphi 0, %s102
      %s120 = sphi 0, %s120
      %s122 = sphi 0, %s120
      %s123 = sphi 0, %s122
      %s137 = sphi 0, %s123
      %s143 = sphi 0, %s145
      %s146 = sphi 0, %s143
      %s147 = sphi 0, %s146
      %s163 = sphi 0, %s147
      %s169 = sphi 0, %s171
      %s172 = sphi 0, %s169
      %s173 = sphi 0, %s172
      %s189 = sphi 0, %s173
    $region4: #{tpu_custom_call.1} parent=1 // loop_header_branch
      %26 = sbr.rel (%p24) target = $region8
    $region5: #{tpu_custom_call.1} parent=1 // loop_body
      %s28 = ssub.s32 %s23, 1
      %s29 = ssub.s32 %s23, 2
      %s30 = sadd.s32 %s23, 1
      %s31 = ssub.s32 %s23, %s30
      %p32 = scmp.eq.s32.totalorder %s31, 0
      %s34 = sadd.s32 %s33, 1
      %s35 = scalar_select %p32, %s33, %s34
      %p38 = pneg %p32
      %p39 = scmp.eq.s32.totalorder %s23, 1
      %p40 = por %p38, %p39
      %p41 = scmp.ne.s32.totalorder %s33, %s36
      %p42 = scmp.eq.s32.totalorder %s23, 0
      %p43 = por %p41, %p42
      %p44 = scmp.ne.s32.totalorder %s33, %s36
      %p45 = scmp.eq.s32.totalorder %s28, 1
      %p46 = por %p44, %p45
      %p47 = scmp.ne.s32.totalorder %s36, %s37
      %p48 = scmp.eq.s32.totalorder %s28, 0
      %p49 = por %p47, %p48
      %p50 = scmp.ne.s32.totalorder %s36, %s37
      %p51 = scmp.eq.s32.totalorder %s29, 1
      %p52 = por %p50, %p51
      %p54 = scmp.ne.s32.totalorder %s37, %s53
      %p55 = scmp.eq.s32.totalorder %s29, 0
      %p56 = por %p54, %p55
      %s58 = sadd.s32 %s57, 1
      %p61 = scmp.eq.s32.totalorder %s23, 1
      %p62 = scmp.ne.s32.totalorder %s57, %s59
      %p63 = scmp.eq.s32.totalorder %s23, 0
      %p64 = por %p62, %p63
      %p65 = scmp.ne.s32.totalorder %s57, %s59
      %p66 = scmp.eq.s32.totalorder %s28, 1
      %p67 = por %p65, %p66
      %p68 = scmp.ne.s32.totalorder %s59, %s60
      %p69 = scmp.eq.s32.totalorder %s28, 0
      %p70 = por %p68, %p69
      %p71 = scmp.ne.s32.totalorder %s59, %s60
      %p72 = scmp.eq.s32.totalorder %s29, 1
      %p73 = por %p71, %p72
      %p75 = scmp.ne.s32.totalorder %s60, %s74
      %p76 = scmp.eq.s32.totalorder %s29, 0
      %p77 = por %p75, %p76
      %s79 = sadd.s32 %s78, 1
      %p82 = scmp.eq.s32.totalorder %s23, 1
      %p83 = scmp.ne.s32.totalorder %s78, %s80
      %p84 = scmp.eq.s32.totalorder %s23, 0
      %p85 = por %p83, %p84
      %p86 = scmp.ne.s32.totalorder %s78, %s80
      %p87 = scmp.eq.s32.totalorder %s28, 1
      %p88 = por %p86, %p87
      %p89 = scmp.ne.s32.totalorder %s80, %s81
      %p90 = scmp.eq.s32.totalorder %s28, 0
      %p91 = por %p89, %p90
      %p92 = scmp.ne.s32.totalorder %s80, %s81
      %p93 = scmp.eq.s32.totalorder %s29, 1
      %p94 = por %p92, %p93
      %p96 = scmp.ne.s32.totalorder %s81, %s95
      %p97 = scmp.eq.s32.totalorder %s29, 0
      %p98 = por %p96, %p97
      %s100 = sadd.s32 %s99, 1
      %p103 = scmp.eq.s32.totalorder %s23, 1
      %p104 = scmp.ne.s32.totalorder %s99, %s101
      %p105 = scmp.eq.s32.totalorder %s23, 0
      %p106 = por %p104, %p105
      %p107 = scmp.ne.s32.totalorder %s99, %s101
      %p108 = scmp.eq.s32.totalorder %s28, 1
      %p109 = por %p107, %p108
      %p110 = scmp.ne.s32.totalorder %s101, %s102
      %p111 = scmp.eq.s32.totalorder %s28, 0
      %p112 = por %p110, %p111
      %p113 = scmp.ne.s32.totalorder %s101, %s102
      %p114 = scmp.eq.s32.totalorder %s29, 1
      %p115 = por %p113, %p114
      %p117 = scmp.ne.s32.totalorder %s102, %s116
      %p118 = scmp.eq.s32.totalorder %s29, 0
      %p119 = por %p117, %p118
      %s121 = sadd.s32 %s120, 1
      %p124 = scmp.eq.s32.totalorder %s23, 1
      %p125 = scmp.ne.s32.totalorder %s120, %s122
      %p126 = scmp.eq.s32.totalorder %s23, 0
      %p127 = por %p125, %p126
      %p128 = scmp.ne.s32.totalorder %s120, %s122
      %p129 = scmp.eq.s32.totalorder %s28, 1
      %p130 = por %p128, %p129
      %p131 = scmp.ne.s32.totalorder %s122, %s123
      %p132 = scmp.eq.s32.totalorder %s28, 0
      %p133 = por %p131, %p132
      %p134 = scmp.ne.s32.totalorder %s122, %s123
      %p135 = scmp.eq.s32.totalorder %s29, 1
      %p136 = por %p134, %p135
      %p138 = scmp.ne.s32.totalorder %s123, %s137
      %p139 = scmp.eq.s32.totalorder %s29, 0
      %p140 = por %p138, %p139
      %s141 = ssub.s32 %s23, %s30
      %p142 = scmp.eq.s32.totalorder %s141, 0
      %s144 = sadd.s32 %s143, 1
      %s145 = scalar_select %p142, %s143, %s144
      %p148 = pneg %p142
      %p149 = scmp.eq.s32.totalorder %s23, 1
      %p150 = por %p148, %p149
      %p151 = scmp.ne.s32.totalorder %s143, %s146
      %p152 = scmp.eq.s32.totalorder %s23, 0
      %p153 = por %p151, %p152
      %p154 = scmp.ne.s32.totalorder %s143, %s146
      %p155 = scmp.eq.s32.totalorder %s28, 1
      %p156 = por %p154, %p155
      %p157 = scmp.ne.s32.totalorder %s146, %s147
      %p158 = scmp.eq.s32.totalorder %s28, 0
      %p159 = por %p157, %p158
      %p160 = scmp.ne.s32.totalorder %s146, %s147
      %p161 = scmp.eq.s32.totalorder %s29, 1
      %p162 = por %p160, %p161
      %p164 = scmp.ne.s32.totalorder %s147, %s163
      %p165 = scmp.eq.s32.totalorder %s29, 0
      %p166 = por %p164, %p165
      %s167 = ssub.s32 %s23, %s30
      %p168 = scmp.eq.s32.totalorder %s167, 0
      %s170 = sadd.s32 %s169, 1
      %s171 = scalar_select %p168, %s169, %s170
      %p174 = pneg %p168
      %p175 = scmp.eq.s32.totalorder %s23, 1
      %p176 = por %p174, %p175
      %p177 = scmp.ne.s32.totalorder %s169, %s172
      %p178 = scmp.eq.s32.totalorder %s23, 0
      %p179 = por %p177, %p178
      %p180 = scmp.ne.s32.totalorder %s169, %s172
      %p181 = scmp.eq.s32.totalorder %s28, 1
      %p182 = por %p180, %p181
      %p183 = scmp.ne.s32.totalorder %s172, %s173
      %p184 = scmp.eq.s32.totalorder %s28, 0
      %p185 = por %p183, %p184
      %p186 = scmp.ne.s32.totalorder %s172, %s173
      %p187 = scmp.eq.s32.totalorder %s29, 1
      %p188 = por %p186, %p187
      %p190 = scmp.ne.s32.totalorder %s173, %s189
      %p191 = scmp.eq.s32.totalorder %s29, 0
      %p192 = por %p190, %p191
      %p193 = scmp.le.s32.totalorder 1, %s23
      %p194 = scmp.lt.s32.totalorder %s23, 3
      %p195 = pnand %p193, %p194
      %p196 = pneg %p195
      // Predicated region
      $region9: #{tpu_custom_call.1} parent=5 // pred_check
        _
      $region10: #{tpu_custom_call.1} parent=5 // pred_check_branch
        %198 = sbr.rel (%p195) target = $region12
      $region11: #{tpu_custom_call.1} parent=5 // pred_region
        %s199 = ssub.s32 %s23, 1
        // Predicated region
        $region13: #{tpu_custom_call.1} parent=11 // pred_check
          %p200 = pneg %p70
        $region14: #{tpu_custom_call.1} parent=11 // pred_check_branch
          %202 = sbr.rel (%p200) target = $region16
        $region15: #{tpu_custom_call.1} parent=11 // pred_region
          %s204 = ssub.s32 2048, 2048
          %205 = vsyncadd [#allocation6], %s204
          %s206 = sshll.u32 [#allocation5], 4
          %s207 = int_to_ptr.vmem [resolvable:$true] %s206
          %212 = dma.hbm_to_vmem [thread:$0]  %s1, 2048, %s207, [#allocation6], 128, 128, 8
        $region16: #{tpu_custom_call.1} parent=11 // pred_fallthru
          _
        // Predicated region
        $region17: #{tpu_custom_call.1} parent=11 // pred_check
          %p213 = pneg %p91
        $region18: #{tpu_custom_call.1} parent=11 // pred_check_branch
          %215 = sbr.rel (%p213) target = $region20
        $region19: #{tpu_custom_call.1} parent=11 // pred_region
          _
        $region20: #{tpu_custom_call.1} parent=11 // pred_fallthru
          _
        // Predicated region
        $region21: #{tpu_custom_call.1} parent=11 // pred_check
          %p216 = pneg %p112
        $region22: #{tpu_custom_call.1} parent=11 // pred_check_branch
          %218 = sbr.rel (%p216) target = $region24
        $region23: #{tpu_custom_call.1} parent=11 // pred_region
          %s220 = ssub.s32 1024, 1024
          %221 = vsyncadd [#allocation6], %s220
          %s222 = sshll.u32 [#allocation7], 4
          %s223 = int_to_ptr.vmem [resolvable:$true] %s222
          %228 = dma.hbm_to_vmem [thread:$0]  %s3, 1024, %s223, [#allocation6], 64, 64, 4
        $region24: #{tpu_custom_call.1} parent=11 // pred_fallthru
          _
        // Predicated region
        $region25: #{tpu_custom_call.1} parent=11 // pred_check
          %p229 = pneg %p133
        $region26: #{tpu_custom_call.1} parent=11 // pred_check_branch
          %231 = sbr.rel (%p229) target = $region28
        $region27: #{tpu_custom_call.1} parent=11 // pred_region
          _
        $region28: #{tpu_custom_call.1} parent=11 // pred_fallthru
          _
      $region12: #{tpu_custom_call.1} parent=5 // pred_fallthru
        _
      %p232 = scmp.lt.s32.totalorder %s23, 2
      // Predicated region
      $region29: #{tpu_custom_call.1} parent=5 // pred_check
        %p233 = pneg %p232
      $region30: #{tpu_custom_call.1} parent=5 // pred_check_branch
        %235 = sbr.rel (%p233) target = $region32
      $region31: #{tpu_custom_call.1} parent=5 // pred_region
        // Predicated region
        $region33: #{tpu_custom_call.1} parent=31 // pred_check
          %p236 = pneg %p43
        $region34: #{tpu_custom_call.1} parent=31 // pred_check_branch
          %238 = sbr.rel (%p236) target = $region36
        $region35: #{tpu_custom_call.1} parent=31 // pred_region
          %s239 = sand.u32 %s33, 1
          %s240 = scalar_lea.sflag [#allocation3], %s239
          %s241 = sand.u32 %s33, 1
          %s242 = smul.addr %s241, 64
          %s243 = scalar_lea.vmem [#allocation2], %s242
          %s245 = ssub.s32 1024, 1024
          %246 = vsyncadd %s240, %s245
          %s247 = smul.addr %s23, 16
          %s248 = smul.addr %s247, 64
          %s249 = scalar_lea.hbm %s0, %s248
          %s250 = sshll.u32 %s243, 4
          %s251 = int_to_ptr.vmem [resolvable:$true] %s250
          %256 = dma.hbm_to_vmem [thread:$0]  %s249, 1024, %s251, %s240, 64, 64, 4
        $region36: #{tpu_custom_call.1} parent=31 // pred_fallthru
          _
      $region32: #{tpu_custom_call.1} parent=5 // pred_fallthru
        _
      %p257 = scmp.le.s32.totalorder 1, %s23
      %p258 = scmp.lt.s32.totalorder %s23, 3
      %p259 = pnand %p257, %p258
      %p260 = pneg %p259
      // Predicated region
      $region37: #{tpu_custom_call.1} parent=5 // pred_check
        _
      $region38: #{tpu_custom_call.1} parent=5 // pred_check_branch
        %262 = sbr.rel (%p259) target = $region40
      $region39: #{tpu_custom_call.1} parent=5 // pred_region
        %s263 = ssub.s32 %s23, 1
        %s264 = sand.u32 %s36, 1
        %s265 = scalar_lea.sflag [#allocation3], %s264
        %s266 = sand.u32 %s36, 1
        %s267 = smul.addr %s266, 64
        %s268 = scalar_lea.vmem [#allocation2], %s267
        // Predicated region
        $region41: #{tpu_custom_call.1} parent=39 // pred_check
          %p269 = pneg %p49
        $region42: #{tpu_custom_call.1} parent=39 // pred_check_branch
          %271 = sbr.rel (%p269) target = $region44
        $region43: #{tpu_custom_call.1} parent=39 // pred_region
          %272 = dma.done %s265, 1024
        $region44: #{tpu_custom_call.1} parent=39 // pred_fallthru
          _
        // Predicated region
        $region45: #{tpu_custom_call.1} parent=39 // pred_check
          %p273 = pneg %p70
        $region46: #{tpu_custom_call.1} parent=39 // pred_check_branch
          %275 = sbr.rel (%p273) target = $region48
        $region47: #{tpu_custom_call.1} parent=39 // pred_region
          %276 = dma.done [#allocation6], 2048
        $region48: #{tpu_custom_call.1} parent=39 // pred_fallthru
          _
        // Predicated region
        $region49: #{tpu_custom_call.1} parent=39 // pred_check
          %p277 = pneg %p112
        $region50: #{tpu_custom_call.1} parent=39 // pred_check_branch
          %279 = sbr.rel (%p277) target = $region52
        $region51: #{tpu_custom_call.1} parent=39 // pred_region
          %280 = dma.done [#allocation6], 1024
        $region52: #{tpu_custom_call.1} parent=39 // pred_fallthru
          _
        %s281 = sand.u32 %s36, 1
        %s282 = scalar_lea.sflag [#allocation3], %s281
        %s283 = sand.u32 %s36, 1
        %s284 = smul.addr %s283, 64
        %s285 = scalar_lea.vmem [#allocation2], %s284
        %p286 = pneg %p49
        %p287 = pneg %p46
        %p288 = pneg %p70
        %p289 = pneg %p67
        %p290 = pneg %p91
        %p291 = pneg %p88
        %p292 = pneg %p112
        %p293 = pneg %p109
        %p294 = pneg %p133
        %p295 = pneg %p130
        %p296 = pneg %p159
        %p297 = pneg %p156
        %s298 = sand.u32 %s146, 1
        %s299 = scalar_lea.sflag [#allocation4], %s298
        %s300 = sand.u32 %s146, 1
        %s301 = smul.addr %s300, 64
        %s302 = scalar_lea.vmem [#allocation8], %s301
        %p303 = pneg %p185
        %p304 = pneg %p182
        %s305 = sand.u32 %s172, 1
        %s306 = scalar_lea.sflag [#allocation10], %s305
        %s307 = sand.u32 %s172, 1
        %s308 = smul.addr %s307, 64
        %s309 = scalar_lea.vmem [#allocation9], %s308
        %v311 = vld [vmem:[%s268] sm:$0xf]
        %v312 = vld [vmem:[%s268 + $0x4] sm:$0xf]
        %v313 = vld [vmem:[%s268 + $0x8] sm:$0xf]
        %v314 = vld [vmem:[%s268 + $0xc] sm:$0xf]
        %v315 = vld [vmem:[%s268 + $0x10] sm:$0xf]
        %v316 = vld [vmem:[%s268 + $0x14] sm:$0xf]
        %v317 = vld [vmem:[%s268 + $0x18] sm:$0xf]
        %v318 = vld [vmem:[%s268 + $0x1c] sm:$0xf]
        %v319 = vld [vmem:[%s268 + $0x20] sm:$0xf]
        %v320 = vld [vmem:[%s268 + $0x24] sm:$0xf]
        %v321 = vld [vmem:[%s268 + $0x28] sm:$0xf]
        %v322 = vld [vmem:[%s268 + $0x2c] sm:$0xf]
        %v323 = vld [vmem:[%s268 + $0x30] sm:$0xf]
        %v324 = vld [vmem:[%s268 + $0x34] sm:$0xf]
        %v325 = vld [vmem:[%s268 + $0x38] sm:$0xf]
        %v326 = vld [vmem:[%s268 + $0x3c] sm:$0xf]
        %v327 = vld [vmem:[#allocation5] sm:$0xff]
        %v328 = vld [vmem:[#allocation5 + $0x8] sm:$0xff]
        %v329 = vld [vmem:[#allocation5 + $0x10] sm:$0xff]
        %v330 = vld [vmem:[#allocation5 + $0x18] sm:$0xff]
        %v331 = vld [vmem:[#allocation5 + $0x20] sm:$0xff]
        %v332 = vld [vmem:[#allocation5 + $0x28] sm:$0xff]
        %v333 = vld [vmem:[#allocation5 + $0x30] sm:$0xff]
        %v334 = vld [vmem:[#allocation5 + $0x38] sm:$0xff]
        %v335 = vld [vmem:[#allocation5 + $0x40] sm:$0xff]
        %v336 = vld [vmem:[#allocation5 + $0x48] sm:$0xff]
        %v337 = vld [vmem:[#allocation5 + $0x50] sm:$0xff]
        %v338 = vld [vmem:[#allocation5 + $0x58] sm:$0xff]
        %v339 = vld [vmem:[#allocation5 + $0x60] sm:$0xff]
        %v340 = vld [vmem:[#allocation5 + $0x68] sm:$0xff]
        %v341 = vld [vmem:[#allocation5 + $0x70] sm:$0xff]
        %v342 = vld [vmem:[#allocation5 + $0x78] sm:$0xff]
        %v343 = vld [vmem:[%s2] sm:$0x3]
        %v345 = vlaneseq
        %v346 = vshrl.u32 %v345, 7
        %v347 = vsub.s32 0, %v346
        %v348 = vrot.slane %v343, %v347
        %v349 = vlaneseq
        %v350 = vshrl.u32 %v349, 7
        %v351 = vsub.s32 1, %v350
        %v352 = vrot.slane %v343, %v351
        %v371 = vunpack.c.l.b16 %v311
        %v372 = vunpack.c.l.b16 %v312
        %v373 = vunpack.c.l.b16 %v313
        %v374 = vunpack.c.l.b16 %v314
        %v375 = vunpack.c.l.b16 %v315
        %v376 = vunpack.c.l.b16 %v316
        %v377 = vunpack.c.l.b16 %v317
        %v378 = vunpack.c.l.b16 %v318
        %v379 = vunpack.c.l.b16 %v319
        %v380 = vunpack.c.l.b16 %v320
        %v381 = vunpack.c.l.b16 %v321
        %v382 = vunpack.c.l.b16 %v322
        %v383 = vunpack.c.l.b16 %v323
        %v384 = vunpack.c.l.b16 %v324
        %v385 = vunpack.c.l.b16 %v325
        %v386 = vunpack.c.l.b16 %v326
        %v387 = vpack.c.b16 %v372, %v371
        %v388 = vpack.c.b16 %v374, %v373
        %v389 = vpack.c.b16 %v376, %v375
        %v390 = vpack.c.b16 %v378, %v377
        %v391 = vpack.c.b16 %v380, %v379
        %v392 = vpack.c.b16 %v382, %v381
        %v393 = vpack.c.b16 %v384, %v383
        %v394 = vpack.c.b16 %v386, %v385
        %v419 = vunpack.c.l.b16 %v327
        %v420 = vunpack.c.h.b16 %v327
        %v421 = vunpack.c.l.b16 %v328
        %v422 = vunpack.c.h.b16 %v328
        %v423 = vunpack.c.l.b16 %v329
        %v424 = vunpack.c.h.b16 %v329
        %v425 = vunpack.c.l.b16 %v330
        %v426 = vunpack.c.h.b16 %v330
        %v427 = vunpack.c.l.b16 %v331
        %v428 = vunpack.c.h.b16 %v331
        %v429 = vunpack.c.l.b16 %v332
        %v430 = vunpack.c.h.b16 %v332
        %v431 = vunpack.c.l.b16 %v333
        %v432 = vunpack.c.h.b16 %v333
        %v433 = vunpack.c.l.b16 %v334
        %v434 = vunpack.c.h.b16 %v334
        %v435 = vunpack.c.l.b16 %v335
        %v436 = vunpack.c.h.b16 %v335
        %v437 = vunpack.c.l.b16 %v336
        %v438 = vunpack.c.h.b16 %v336
        %v439 = vunpack.c.l.b16 %v337
        %v440 = vunpack.c.h.b16 %v337
        %v441 = vunpack.c.l.b16 %v338
        %v442 = vunpack.c.h.b16 %v338
        %v443 = vunpack.c.l.b16 %v339
        %v444 = vunpack.c.h.b16 %v339
        %v445 = vunpack.c.l.b16 %v340
        %v446 = vunpack.c.h.b16 %v340
        %v447 = vunpack.c.l.b16 %v341
        %v448 = vunpack.c.h.b16 %v341
        %v449 = vunpack.c.l.b16 %v342
        %v450 = vunpack.c.h.b16 %v342
        %v451 = vpack.c.b16 %v421, %v419
        %v452 = vpack.c.b16 %v422, %v420
        %v453 = vpack.c.b16 %v425, %v423
        %v454 = vpack.c.b16 %v426, %v424
        %v455 = vpack.c.b16 %v429, %v427
        %v456 = vpack.c.b16 %v430, %v428
        %v457 = vpack.c.b16 %v433, %v431
        %v458 = vpack.c.b16 %v434, %v432
        %v459 = vpack.c.b16 %v437, %v435
        %v460 = vpack.c.b16 %v438, %v436
        %v461 = vpack.c.b16 %v441, %v439
        %v462 = vpack.c.b16 %v442, %v440
        %v463 = vpack.c.b16 %v445, %v443
        %v464 = vpack.c.b16 %v446, %v444
        %v465 = vpack.c.b16 %v449, %v447
        %v466 = vpack.c.b16 %v450, %v448
        %483 = vmatprep.subr.bf16.mxu0 %v452
        %484 = vmatpush1.bf16.msra.mxu0 %v451
        %485 = vmatprep.subr.bf16.mxu0 %v454
        %486 = vmatpush1.bf16.msra.mxu0 %v453
        %487 = vmatprep.subr.bf16.mxu0 %v456
        %488 = vmatpush1.bf16.msra.mxu0 %v455
        %489 = vmatprep.subr.bf16.mxu0 %v458
        %490 = vmatpush1.bf16.msra.mxu0 %v457
        %491 = vmatprep.subr.bf16.mxu0 %v460
        %492 = vmatpush1.bf16.msra.mxu0 %v459
        %493 = vmatprep.subr.bf16.mxu0 %v462
        %494 = vmatpush1.bf16.msra.mxu0 %v461
        %495 = vmatprep.subr.bf16.mxu0 %v464
        %496 = vmatpush1.bf16.msra.mxu0 %v463
        %497 = vmatprep.subr.bf16.mxu0 %v466
        %498 = vmatpush1.bf16.msra.mxu0 %v465
        %499 = vmatprep.subr.bf16.mxu0 0
        %500 = vmatpush1.bf16.msra.mxu0 0
        %501 = vmatprep.subr.bf16.mxu0 0
        %502 = vmatpush1.bf16.msra.mxu0 0
        %503 = vmatprep.subr.bf16.mxu0 0
        %504 = vmatpush1.bf16.msra.mxu0 0
        %505 = vmatprep.subr.bf16.mxu0 0
        %506 = vmatpush1.bf16.msra.mxu0 0
        %507 = vmatprep.subr.bf16.mxu0 0
        %508 = vmatpush1.bf16.msra.mxu0 0
        %509 = vmatprep.subr.bf16.mxu0 0
        %510 = vmatpush1.bf16.msra.mxu0 0
        %511 = vmatprep.subr.bf16.mxu0 0
        %512 = vmatpush1.bf16.msra.mxu0 0
        %513 = vmatprep.subr.bf16.mxu0 0
        %514 = vmatpush1.bf16.msra.mxu0 0
        %515 = vmatprep.mubr.bf16.mxu0 0
        %516 = vmatmul.mubr.bf16.gmra.mrb[0].mxu0 %v387
        %v517 = vpop.f32.mrb[0].mxu0
        %v518 = vadd.f32 %v348, %v517
        %v519 = vpop.f32.mrb[0].mxu0
        %v520 = vadd.f32 %v352, %v519
        %v521 = vpop.f32.mrb[0].mxu0
        %v522 = vadd.f32 %v348, %v521
        %v523 = vpop.f32.mrb[0].mxu0
        %v524 = vadd.f32 %v352, %v523
        %525 = vmatprep.mubr.bf16.mxu0 0
        %526 = vmatmul.mubr.bf16.gmra.mrb[0].mxu0 %v388
        %v527 = vpop.f32.mrb[0].mxu0
        %v528 = vadd.f32 %v348, %v527
        %v529 = vpop.f32.mrb[0].mxu0
        %v530 = vadd.f32 %v352, %v529
        %v531 = vpop.f32.mrb[0].mxu0
        %v532 = vadd.f32 %v348, %v531
        %v533 = vpop.f32.mrb[0].mxu0
        %v534 = vadd.f32 %v352, %v533
        %535 = vmatprep.mubr.bf16.mxu0 0
        %536 = vmatmul.mubr.bf16.gmra.mrb[0].mxu0 %v389
        %v537 = vpop.f32.mrb[0].mxu0
        %v538 = vadd.f32 %v348, %v537
        %v539 = vpop.f32.mrb[0].mxu0
        %v540 = vadd.f32 %v352, %v539
        %v541 = vpop.f32.mrb[0].mxu0
        %v542 = vadd.f32 %v348, %v541
        %v543 = vpop.f32.mrb[0].mxu0
        %v544 = vadd.f32 %v352, %v543
        %545 = vmatprep.mubr.bf16.mxu0 0
        %546 = vmatmul.mubr.bf16.gmra.mrb[0].mxu0 %v390
        %v547 = vpop.f32.mrb[0].mxu0
        %v548 = vadd.f32 %v348, %v547
        %v549 = vpop.f32.mrb[0].mxu0
        %v550 = vadd.f32 %v352, %v549
        %v551 = vpop.f32.mrb[0].mxu0
        %v552 = vadd.f32 %v348, %v551
        %v553 = vpop.f32.mrb[0].mxu0
        %v554 = vadd.f32 %v352, %v553
        %555 = vmatprep.mubr.bf16.mxu0 0
        %556 = vmatmul.mubr.bf16.gmra.mrb[0].mxu0 %v391
        %v557 = vpop.f32.mrb[0].mxu0
        %v558 = vadd.f32 %v348, %v557
        %v559 = vpop.f32.mrb[0].mxu0
        %v560 = vadd.f32 %v352, %v559
        %v561 = vpop.f32.mrb[0].mxu0
        %v562 = vadd.f32 %v348, %v561
        %v563 = vpop.f32.mrb[0].mxu0
        %v564 = vadd.f32 %v352, %v563
        %565 = vmatprep.mubr.bf16.mxu0 0
        %566 = vmatmul.mubr.bf16.gmra.mrb[0].mxu0 %v392
        %v567 = vpop.f32.mrb[0].mxu0
        %v568 = vadd.f32 %v348, %v567
        %v569 = vpop.f32.mrb[0].mxu0
        %v570 = vadd.f32 %v352, %v569
        %v571 = vpop.f32.mrb[0].mxu0
        %v572 = vadd.f32 %v348, %v571
        %v573 = vpop.f32.mrb[0].mxu0
        %v574 = vadd.f32 %v352, %v573
        %575 = vmatprep.mubr.bf16.mxu0 0
        %576 = vmatmul.mubr.bf16.gmra.mrb[0].mxu0 %v393
        %v577 = vpop.f32.mrb[0].mxu0
        %v578 = vadd.f32 %v348, %v577
        %v579 = vpop.f32.mrb[0].mxu0
        %v580 = vadd.f32 %v352, %v579
        %v581 = vpop.f32.mrb[0].mxu0
        %v582 = vadd.f32 %v348, %v581
        %v583 = vpop.f32.mrb[0].mxu0
        %v584 = vadd.f32 %v352, %v583
        %585 = vmatprep.mubr.bf16.mxu0 0
        %586 = vmatmul.mubr.bf16.gmra.mrb[0].mxu0 %v394
        %v587 = vpop.f32.mrb[0].mxu0
        %v588 = vadd.f32 %v348, %v587
        %v589 = vpop.f32.mrb[0].mxu0
        %v590 = vadd.f32 %v352, %v589
        %v591 = vpop.f32.mrb[0].mxu0
        %v592 = vadd.f32 %v348, %v591
        %v593 = vpop.f32.mrb[0].mxu0
        %v594 = vadd.f32 %v352, %v593
        %595 = vdwg.mxu0
        %v596 = vmax.f32 %v518, 0.0
        %v597 = vmax.f32 %v520, 0.0
        %v598 = vmax.f32 %v522, 0.0
        %v599 = vmax.f32 %v524, 0.0
        %v600 = vmax.f32 %v528, 0.0
        %v601 = vmax.f32 %v530, 0.0
        %v602 = vmax.f32 %v532, 0.0
        %v603 = vmax.f32 %v534, 0.0
        %v604 = vmax.f32 %v538, 0.0
        %v605 = vmax.f32 %v540, 0.0
        %v606 = vmax.f32 %v542, 0.0
        %v607 = vmax.f32 %v544, 0.0
        %v608 = vmax.f32 %v548, 0.0
        %v609 = vmax.f32 %v550, 0.0
        %v610 = vmax.f32 %v552, 0.0
        %v611 = vmax.f32 %v554, 0.0
        %v612 = vmax.f32 %v558, 0.0
        %v613 = vmax.f32 %v560, 0.0
        %v614 = vmax.f32 %v562, 0.0
        %v615 = vmax.f32 %v564, 0.0
        %v616 = vmax.f32 %v568, 0.0
        %v617 = vmax.f32 %v570, 0.0
        %v618 = vmax.f32 %v572, 0.0
        %v619 = vmax.f32 %v574, 0.0
        %v620 = vmax.f32 %v578, 0.0
        %v621 = vmax.f32 %v580, 0.0
        %v622 = vmax.f32 %v582, 0.0
        %v623 = vmax.f32 %v584, 0.0
        %v624 = vmax.f32 %v588, 0.0
        %v625 = vmax.f32 %v590, 0.0
        %v626 = vmax.f32 %v592, 0.0
        %v627 = vmax.f32 %v594, 0.0
        %v628 = vpack.c.bf16 %v598, %v596
        %v629 = vpack.c.bf16 %v602, %v600
        %v630 = vpack.c.bf16 %v606, %v604
        %v631 = vpack.c.bf16 %v610, %v608
        %v632 = vpack.c.bf16 %v614, %v612
        %v633 = vpack.c.bf16 %v618, %v616
        %v634 = vpack.c.bf16 %v622, %v620
        %v635 = vpack.c.bf16 %v626, %v624
        %v636 = vld [vmem:[#allocation7] sm:$0xf]
        %v637 = vld [vmem:[#allocation7 + $0x4] sm:$0xf]
        %v638 = vld [vmem:[#allocation7 + $0x8] sm:$0xf]
        %v639 = vld [vmem:[#allocation7 + $0xc] sm:$0xf]
        %v640 = vld [vmem:[#allocation7 + $0x10] sm:$0xf]
        %v641 = vld [vmem:[#allocation7 + $0x14] sm:$0xf]
        %v642 = vld [vmem:[#allocation7 + $0x18] sm:$0xf]
        %v643 = vld [vmem:[#allocation7 + $0x1c] sm:$0xf]
        %v644 = vld [vmem:[#allocation7 + $0x20] sm:$0xf]
        %v645 = vld [vmem:[#allocation7 + $0x24] sm:$0xf]
        %v646 = vld [vmem:[#allocation7 + $0x28] sm:$0xf]
        %v647 = vld [vmem:[#allocation7 + $0x2c] sm:$0xf]
        %v648 = vld [vmem:[#allocation7 + $0x30] sm:$0xf]
        %v649 = vld [vmem:[#allocation7 + $0x34] sm:$0xf]
        %v650 = vld [vmem:[#allocation7 + $0x38] sm:$0xf]
        %v651 = vld [vmem:[#allocation7 + $0x3c] sm:$0xf]
        %v652 = vld [vmem:[%s4] sm:$0x1]
        %v654 = vlaneseq
        %v655 = vshrl.u32 %v654, 7
        %v656 = vsub.s32 0, %v655
        %v657 = vrot.slane %v652, %v656
        %v675 = vunpack.c.l.b16 %v636
        %v676 = vunpack.c.l.b16 %v637
        %v677 = vunpack.c.l.b16 %v638
        %v678 = vunpack.c.l.b16 %v639
        %v679 = vunpack.c.l.b16 %v640
        %v680 = vunpack.c.l.b16 %v641
        %v681 = vunpack.c.l.b16 %v642
        %v682 = vunpack.c.l.b16 %v643
        %v683 = vunpack.c.l.b16 %v644
        %v684 = vunpack.c.l.b16 %v645
        %v685 = vunpack.c.l.b16 %v646
        %v686 = vunpack.c.l.b16 %v647
        %v687 = vunpack.c.l.b16 %v648
        %v688 = vunpack.c.l.b16 %v649
        %v689 = vunpack.c.l.b16 %v650
        %v690 = vunpack.c.l.b16 %v651
        %v691 = vpack.c.b16 %v676, %v675
        %v692 = vpack.c.b16 %v678, %v677
        %v693 = vpack.c.b16 %v680, %v679
        %v694 = vpack.c.b16 %v682, %v681
        %v695 = vpack.c.b16 %v684, %v683
        %v696 = vpack.c.b16 %v686, %v685
        %v697 = vpack.c.b16 %v688, %v687
        %v698 = vpack.c.b16 %v690, %v689
        %707 = vmatprep.subr.bf16.mxu0 0
        %708 = vmatpush1.bf16.msra.mxu0 %v691
        %709 = vmatprep.subr.bf16.mxu0 0
        %710 = vmatpush1.bf16.msra.mxu0 %v692
        %711 = vmatprep.subr.bf16.mxu0 0
        %712 = vmatpush1.bf16.msra.mxu0 %v693
        %713 = vmatprep.subr.bf16.mxu0 0
        %714 = vmatpush1.bf16.msra.mxu0 %v694
        %715 = vmatprep.subr.bf16.mxu0 0
        %716 = vmatpush1.bf16.msra.mxu0 %v695
        %717 = vmatprep.subr.bf16.mxu0 0
        %718 = vmatpush1.bf16.msra.mxu0 %v696
        %719 = vmatprep.subr.bf16.mxu0 0
        %720 = vmatpush1.bf16.msra.mxu0 %v697
        %721 = vmatprep.subr.bf16.mxu0 0
        %722 = vmatpush1.bf16.msra.mxu0 %v698
        %723 = vmatprep.subr.bf16.mxu0 0
        %724 = vmatpush1.bf16.msra.mxu0 0
        %725 = vmatprep.subr.bf16.mxu0 0
        %726 = vmatpush1.bf16.msra.mxu0 0
        %727 = vmatprep.subr.bf16.mxu0 0
        %728 = vmatpush1.bf16.msra.mxu0 0
        %729 = vmatprep.subr.bf16.mxu0 0
        %730 = vmatpush1.bf16.msra.mxu0 0
        %731 = vmatprep.subr.bf16.mxu0 0
        %732 = vmatpush1.bf16.msra.mxu0 0
        %733 = vmatprep.subr.bf16.mxu0 0
        %734 = vmatpush1.bf16.msra.mxu0 0
        %735 = vmatprep.subr.bf16.mxu0 0
        %736 = vmatpush1.bf16.msra.mxu0 0
        %737 = vmatprep.subr.bf16.mxu0 0
        %738 = vmatpush1.bf16.msra.mxu0 0
        %739 = vmatprep.mubr.bf16.mxu0 0
        %740 = vmatmul.mubr.bf16.gmra.mrb[0].mxu0 %v628
        %v741 = vpop.f32.mrb[0].mxu0
        %v742 = vadd.f32 %v657, %v741
        %v743 = vpop.f32.mrb[0].mxu0
        %v744 = vpop.f32.mrb[0].mxu0
        %v745 = vadd.f32 %v657, %v744
        %v746 = vpop.f32.mrb[0].mxu0
        %747 = vmatprep.mubr.bf16.mxu0 0
        %748 = vmatmul.mubr.bf16.gmra.mrb[0].mxu0 %v629
        %v749 = vpop.f32.mrb[0].mxu0
        %v750 = vadd.f32 %v657, %v749
        %v751 = vpop.f32.mrb[0].mxu0
        %v752 = vpop.f32.mrb[0].mxu0
        %v753 = vadd.f32 %v657, %v752
        %v754 = vpop.f32.mrb[0].mxu0
        %755 = vmatprep.mubr.bf16.mxu0 0
        %756 = vmatmul.mubr.bf16.gmra.mrb[0].mxu0 %v630
        %v757 = vpop.f32.mrb[0].mxu0
        %v758 = vadd.f32 %v657, %v757
        %v759 = vpop.f32.mrb[0].mxu0
        %v760 = vpop.f32.mrb[0].mxu0
        %v761 = vadd.f32 %v657, %v760
        %v762 = vpop.f32.mrb[0].mxu0
        %763 = vmatprep.mubr.bf16.mxu0 0
        %764 = vmatmul.mubr.bf16.gmra.mrb[0].mxu0 %v631
        %v765 = vpop.f32.mrb[0].mxu0
        %v766 = vadd.f32 %v657, %v765
        %v767 = vpop.f32.mrb[0].mxu0
        %v768 = vpop.f32.mrb[0].mxu0
        %v769 = vadd.f32 %v657, %v768
        %v770 = vpop.f32.mrb[0].mxu0
        %771 = vmatprep.mubr.bf16.mxu0 0
        %772 = vmatmul.mubr.bf16.gmra.mrb[0].mxu0 %v632
        %v773 = vpop.f32.mrb[0].mxu0
        %v774 = vadd.f32 %v657, %v773
        %v775 = vpop.f32.mrb[0].mxu0
        %v776 = vpop.f32.mrb[0].mxu0
        %v777 = vadd.f32 %v657, %v776
        %v778 = vpop.f32.mrb[0].mxu0
        %779 = vmatprep.mubr.bf16.mxu0 0
        %780 = vmatmul.mubr.bf16.gmra.mrb[0].mxu0 %v633
        %v781 = vpop.f32.mrb[0].mxu0
        %v782 = vadd.f32 %v657, %v781
        %v783 = vpop.f32.mrb[0].mxu0
        %v784 = vpop.f32.mrb[0].mxu0
        %v785 = vadd.f32 %v657, %v784
        %v786 = vpop.f32.mrb[0].mxu0
        %787 = vmatprep.mubr.bf16.mxu0 0
        %788 = vmatmul.mubr.bf16.gmra.mrb[0].mxu0 %v634
        %v789 = vpop.f32.mrb[0].mxu0
        %v790 = vadd.f32 %v657, %v789
        %v791 = vpop.f32.mrb[0].mxu0
        %v792 = vpop.f32.mrb[0].mxu0
        %v793 = vadd.f32 %v657, %v792
        %v794 = vpop.f32.mrb[0].mxu0
        %795 = vmatprep.mubr.bf16.mxu0 0
        %796 = vmatmul.mubr.bf16.gmra.mrb[0].mxu0 %v635
        %v797 = vpop.f32.mrb[0].mxu0
        %v798 = vadd.f32 %v657, %v797
        %v799 = vpop.f32.mrb[0].mxu0
        %v800 = vpop.f32.mrb[0].mxu0
        %v801 = vadd.f32 %v657, %v800
        %v802 = vpop.f32.mrb[0].mxu0
        %803 = vdwg.mxu0
        %v804 = vmax.f32 %v742, 0.0
        %v805 = vmax.f32 %v745, 0.0
        %v806 = vmax.f32 %v750, 0.0
        %v807 = vmax.f32 %v753, 0.0
        %v808 = vmax.f32 %v758, 0.0
        %v809 = vmax.f32 %v761, 0.0
        %v810 = vmax.f32 %v766, 0.0
        %v811 = vmax.f32 %v769, 0.0
        %v812 = vmax.f32 %v774, 0.0
        %v813 = vmax.f32 %v777, 0.0
        %v814 = vmax.f32 %v782, 0.0
        %v815 = vmax.f32 %v785, 0.0
        %v816 = vmax.f32 %v790, 0.0
        %v817 = vmax.f32 %v793, 0.0
        %v818 = vmax.f32 %v798, 0.0
        %v819 = vmax.f32 %v801, 0.0
        %820 = vxpose.xlu0.b32.start [1/16] %v804, 128
        %821 = vxpose.xlu0.b32.cont [2/16] %v805, 128
        %822 = vxpose.xlu0.b32.cont [3/16] %v806, 128
        %823 = vxpose.xlu0.b32.cont [4/16] %v807, 128
        %824 = vxpose.xlu0.b32.cont [5/16] %v808, 128
        %825 = vxpose.xlu0.b32.cont [6/16] %v809, 128
        %826 = vxpose.xlu0.b32.cont [7/16] %v810, 128
        %827 = vxpose.xlu0.b32.cont [8/16] %v811, 128
        %828 = vxpose.xlu0.b32.cont [9/16] %v812, 128
        %829 = vxpose.xlu0.b32.cont [10/16] %v813, 128
        %830 = vxpose.xlu0.b32.cont [11/16] %v814, 128
        %831 = vxpose.xlu0.b32.cont [12/16] %v815, 128
        %832 = vxpose.xlu0.b32.cont [13/16] %v816, 128
        %833 = vxpose.xlu0.b32.cont [14/16] %v817, 128
        %834 = vxpose.xlu0.b32.cont [15/16] %v818, 128
        %835 = vxpose.xlu0.b32.end [16/16] %v819, 128
        %v836 = vpop.trf.xlu0
        %v837 = vpop.trf.xlu0
        %v838 = vpop.trf.xlu0
        %v839 = vpop.trf.xlu0
        %v840 = vpop.trf.xlu0
        %v841 = vpop.trf.xlu0
        %v842 = vpop.trf.xlu0
        %v843 = vpop.trf.xlu0
        %v844 = vpop.trf.xlu0
        %v845 = vpop.trf.xlu0
        %v846 = vpop.trf.xlu0
        %v847 = vpop.trf.xlu0
        %v848 = vpop.trf.xlu0
        %v849 = vpop.trf.xlu0
        %v850 = vpop.trf.xlu0
        %v851 = vpop.trf.xlu0
        %v852 = vpack.c.bf16 %v837, %v836
        %v853 = vpack.c.bf16 %v839, %v838
        %v854 = vpack.c.bf16 %v841, %v840
        %v855 = vpack.c.bf16 %v843, %v842
        %v856 = vpack.c.bf16 %v845, %v844
        %v857 = vpack.c.bf16 %v847, %v846
        %v858 = vpack.c.bf16 %v849, %v848
        %v859 = vpack.c.bf16 %v851, %v850
        %v868 = vunpack.c.l.b16 %v852
        %v869 = vunpack.c.h.b16 %v852
        %v870 = vunpack.c.l.b16 %v853
        %v871 = vunpack.c.h.b16 %v853
        %v872 = vunpack.c.l.b16 %v854
        %v873 = vunpack.c.h.b16 %v854
        %v874 = vunpack.c.l.b16 %v855
        %v875 = vunpack.c.h.b16 %v855
        %v876 = vunpack.c.l.b16 %v856
        %v877 = vunpack.c.h.b16 %v856
        %v878 = vunpack.c.l.b16 %v857
        %v879 = vunpack.c.h.b16 %v857
        %v880 = vunpack.c.l.b16 %v858
        %v881 = vunpack.c.h.b16 %v858
        %v882 = vunpack.c.l.b16 %v859
        %v883 = vunpack.c.h.b16 %v859
        %v884 = vpack.c.b16 %v868, %v868
        %v885 = vpack.c.b16 %v869, %v869
        %v886 = vpack.c.b16 %v870, %v870
        %v887 = vpack.c.b16 %v871, %v871
        %v888 = vpack.c.b16 %v872, %v872
        %v889 = vpack.c.b16 %v873, %v873
        %v890 = vpack.c.b16 %v874, %v874
        %v891 = vpack.c.b16 %v875, %v875
        %v892 = vpack.c.b16 %v876, %v876
        %v893 = vpack.c.b16 %v877, %v877
        %v894 = vpack.c.b16 %v878, %v878
        %v895 = vpack.c.b16 %v879, %v879
        %v896 = vpack.c.b16 %v880, %v880
        %v897 = vpack.c.b16 %v881, %v881
        %v898 = vpack.c.b16 %v882, %v882
        %v899 = vpack.c.b16 %v883, %v883
        %916 = vst [vmem:[%s302] sm:$0xf] %v884
        %917 = vst [vmem:[%s302 + $0x4] sm:$0xf] %v885
        %918 = vst [vmem:[%s302 + $0x8] sm:$0xf] %v886
        %919 = vst [vmem:[%s302 + $0xc] sm:$0xf] %v887
        %920 = vst [vmem:[%s302 + $0x10] sm:$0xf] %v888
        %921 = vst [vmem:[%s302 + $0x14] sm:$0xf] %v889
        %922 = vst [vmem:[%s302 + $0x18] sm:$0xf] %v890
        %923 = vst [vmem:[%s302 + $0x1c] sm:$0xf] %v891
        %924 = vst [vmem:[%s302 + $0x20] sm:$0xf] %v892
        %925 = vst [vmem:[%s302 + $0x24] sm:$0xf] %v893
        %926 = vst [vmem:[%s302 + $0x28] sm:$0xf] %v894
        %927 = vst [vmem:[%s302 + $0x2c] sm:$0xf] %v895
        %928 = vst [vmem:[%s302 + $0x30] sm:$0xf] %v896
        %929 = vst [vmem:[%s302 + $0x34] sm:$0xf] %v897
        %930 = vst [vmem:[%s302 + $0x38] sm:$0xf] %v898
        %931 = vst [vmem:[%s302 + $0x3c] sm:$0xf] %v899
        %v932 = vpack.c.bf16 %v599, %v597
        %v933 = vpack.c.bf16 %v603, %v601
        %v934 = vpack.c.bf16 %v607, %v605
        %v935 = vpack.c.bf16 %v611, %v609
        %v936 = vpack.c.bf16 %v615, %v613
        %v937 = vpack.c.bf16 %v619, %v617
        %v938 = vpack.c.bf16 %v623, %v621
        %v939 = vpack.c.bf16 %v627, %v625
        %v948 = vunpack.c.l.b16 %v932
        %v949 = vunpack.c.h.b16 %v932
        %v950 = vunpack.c.l.b16 %v933
        %v951 = vunpack.c.h.b16 %v933
        %v952 = vunpack.c.l.b16 %v934
        %v953 = vunpack.c.h.b16 %v934
        %v954 = vunpack.c.l.b16 %v935
        %v955 = vunpack.c.h.b16 %v935
        %v956 = vunpack.c.l.b16 %v936
        %v957 = vunpack.c.h.b16 %v936
        %v958 = vunpack.c.l.b16 %v937
        %v959 = vunpack.c.h.b16 %v937
        %v960 = vunpack.c.l.b16 %v938
        %v961 = vunpack.c.h.b16 %v938
        %v962 = vunpack.c.l.b16 %v939
        %v963 = vunpack.c.h.b16 %v939
        %v964 = vpack.c.b16 %v948, %v948
        %v965 = vpack.c.b16 %v949, %v949
        %v966 = vpack.c.b16 %v950, %v950
        %v967 = vpack.c.b16 %v951, %v951
        %v968 = vpack.c.b16 %v952, %v952
        %v969 = vpack.c.b16 %v953, %v953
        %v970 = vpack.c.b16 %v954, %v954
        %v971 = vpack.c.b16 %v955, %v955
        %v972 = vpack.c.b16 %v956, %v956
        %v973 = vpack.c.b16 %v957, %v957
        %v974 = vpack.c.b16 %v958, %v958
        %v975 = vpack.c.b16 %v959, %v959
        %v976 = vpack.c.b16 %v960, %v960
        %v977 = vpack.c.b16 %v961, %v961
        %v978 = vpack.c.b16 %v962, %v962
        %v979 = vpack.c.b16 %v963, %v963
        %996 = vst [vmem:[%s309] sm:$0xf] %v964
        %997 = vst [vmem:[%s309 + $0x4] sm:$0xf] %v965
        %998 = vst [vmem:[%s309 + $0x8] sm:$0xf] %v966
        %999 = vst [vmem:[%s309 + $0xc] sm:$0xf] %v967
        %1000 = vst [vmem:[%s309 + $0x10] sm:$0xf] %v968
        %1001 = vst [vmem:[%s309 + $0x14] sm:$0xf] %v969
        %1002 = vst [vmem:[%s309 + $0x18] sm:$0xf] %v970
        %1003 = vst [vmem:[%s309 + $0x1c] sm:$0xf] %v971
        %1004 = vst [vmem:[%s309 + $0x20] sm:$0xf] %v972
        %1005 = vst [vmem:[%s309 + $0x24] sm:$0xf] %v973
        %1006 = vst [vmem:[%s309 + $0x28] sm:$0xf] %v974
        %1007 = vst [vmem:[%s309 + $0x2c] sm:$0xf] %v975
        %1008 = vst [vmem:[%s309 + $0x30] sm:$0xf] %v976
        %1009 = vst [vmem:[%s309 + $0x34] sm:$0xf] %v977
        %1010 = vst [vmem:[%s309 + $0x38] sm:$0xf] %v978
        %1011 = vst [vmem:[%s309 + $0x3c] sm:$0xf] %v979
        %s1012 = sand.u32 %s146, 1
        %s1013 = scalar_lea.sflag [#allocation4], %s1012
        %s1014 = sand.u32 %s146, 1
        %s1015 = smul.addr %s1014, 64
        %s1016 = scalar_lea.vmem [#allocation8], %s1015
        %s1017 = sand.u32 %s172, 1
        %s1018 = scalar_lea.sflag [#allocation10], %s1017
        %s1019 = sand.u32 %s172, 1
        %s1020 = smul.addr %s1019, 64
        %s1021 = scalar_lea.vmem [#allocation9], %s1020
        // Predicated region
        $region53: #{tpu_custom_call.1} parent=39 // pred_check
          %p1022 = pneg %p156
        $region54: #{tpu_custom_call.1} parent=39 // pred_check_branch
          %1024 = sbr.rel (%p1022) target = $region56
        $region55: #{tpu_custom_call.1} parent=39 // pred_region
          %s1026 = ssub.s32 1024, 1024
          %1027 = vsyncadd %s1013, %s1026
          %s1028 = smul.addr %s28, 16
          %s1029 = smul.addr %s1028, 64
          %s1030 = scalar_lea.hbm %s5, %s1029
          %s1031 = sshll.u32 %s1016, 4
          %s1032 = int_to_ptr.vmem [resolvable:$true] %s1031
          %1037 = dma.vmem_to_hbm [thread:$0]  %s1032, 1024, %s1030, %s1013, 64, 64, 4
        $region56: #{tpu_custom_call.1} parent=39 // pred_fallthru
          _
        // Predicated region
        $region57: #{tpu_custom_call.1} parent=39 // pred_check
          %p1038 = pneg %p182
        $region58: #{tpu_custom_call.1} parent=39 // pred_check_branch
          %1040 = sbr.rel (%p1038) target = $region60
        $region59: #{tpu_custom_call.1} parent=39 // pred_region
          %s1042 = ssub.s32 1024, 1024
          %1043 = vsyncadd %s1018, %s1042
          %s1044 = smul.addr %s28, 16
          %s1045 = smul.addr %s1044, 64
          %s1046 = scalar_lea.hbm %s6, %s1045
          %s1047 = sshll.u32 %s1021, 4
          %s1048 = int_to_ptr.vmem [resolvable:$true] %s1047
          %1053 = dma.vmem_to_hbm [thread:$0]  %s1048, 1024, %s1046, %s1018, 64, 64, 4
        $region60: #{tpu_custom_call.1} parent=39 // pred_fallthru
          _
      $region40: #{tpu_custom_call.1} parent=5 // pred_fallthru
        _
      %p1054 = scmp.le.s32.totalorder 2, %s23
      // Predicated region
      $region61: #{tpu_custom_call.1} parent=5 // pred_check
        %p1055 = pneg %p1054
      $region62: #{tpu_custom_call.1} parent=5 // pred_check_branch
        %1057 = sbr.rel (%p1055) target = $region64
      $region63: #{tpu_custom_call.1} parent=5 // pred_region
        %s1058 = ssub.s32 %s23, 2
        // Predicated region
        $region65: #{tpu_custom_call.1} parent=63 // pred_check
          %p1059 = pneg %p162
        $region66: #{tpu_custom_call.1} parent=63 // pred_check_branch
          %1061 = sbr.rel (%p1059) target = $region68
        $region67: #{tpu_custom_call.1} parent=63 // pred_region
          %s1062 = sand.u32 %s147, 1
          %s1063 = scalar_lea.sflag [#allocation4], %s1062
          %s1064 = sand.u32 %s147, 1
          %s1065 = smul.addr %s1064, 64
          %s1066 = scalar_lea.vmem [#allocation8], %s1065
          %1067 = dma.done %s1063, 1024
        $region68: #{tpu_custom_call.1} parent=63 // pred_fallthru
          _
        // Predicated region
        $region69: #{tpu_custom_call.1} parent=63 // pred_check
          %p1068 = pneg %p188
        $region70: #{tpu_custom_call.1} parent=63 // pred_check_branch
          %1070 = sbr.rel (%p1068) target = $region72
        $region71: #{tpu_custom_call.1} parent=63 // pred_region
          %s1071 = sand.u32 %s173, 1
          %s1072 = scalar_lea.sflag [#allocation10], %s1071
          %s1073 = sand.u32 %s173, 1
          %s1074 = smul.addr %s1073, 64
          %s1075 = scalar_lea.vmem [#allocation9], %s1074
          %1076 = dma.done %s1072, 1024
        $region72: #{tpu_custom_call.1} parent=63 // pred_fallthru
          _
      $region64: #{tpu_custom_call.1} parent=5 // pred_fallthru
        _
    $region6: #{tpu_custom_call.1} parent=1 // loop_footer
      %s27 = sadd.s32 1, %s23
    $region7: #{tpu_custom_call.1} parent=1 // loop_footer_branch
      %22 = sbr.rel target = $region3
    $region8: #{tpu_custom_call.1} parent=1 // loop_exit
      _
    %1077 = vsyncpa [#allocation3], 1
    %s1078 = scalar_lea.sflag [#allocation3], 1
    %1079 = vsyncpa %s1078, 1
    %1080 = vsyncpa [#allocation6], 1
    %1081 = vsyncpa [#allocation4], 1
    %s1082 = scalar_lea.sflag [#allocation4], 1
    %1083 = vsyncpa %s1082, 1
    %1084 = vsyncpa [#allocation10], 1
    %s1085 = scalar_lea.sflag [#allocation10], 1
    %1086 = vsyncpa %s1085, 1

</llo_original>
